<compile_context>
chip_gen: v5e
topology: v5e:2x2
jax: 0.10.0
libtpu: 0.0.40
codegen_flags: <defaults>
</compile_context>

<pallas_src>
import jax
import jax.numpy as jnp
from jax import lax
from jax.experimental import pallas as pl
from jax.experimental.pallas import tpu as pltpu


def _round_up(x, m):
    return ((x + m - 1) // m) * m


# --------------------------------------------------------------------------
# Pass 1: accumulate energy over N tiles, then A' = gamma * softmax + I
# --------------------------------------------------------------------------
def _cam_attn_kernel(gamma_ref, x_ref, attn_ref, acc_ref):
    # gamma_ref: (1,) f32 in SMEM
    # x_ref:     (bt, C, tn) block of X in native dtype
    # attn_ref:  (bt, C, C) output block (resident across the N axis)
    # acc_ref:   (bt, C, C) f32 energy accumulator (VMEM scratch)
    nk = pl.program_id(1)

    @pl.when(nk == 0)
    def _():
        acc_ref[...] = jnp.zeros_like(acc_ref)

    x = x_ref[...]
    # energy += X_tile @ X_tile^T: contract the spatial axis of both operands
    # (same contraction pattern as 'bqd,bkd->bqk'); batched over bt.
    acc_ref[...] += lax.dot_general(
        x, x,
        dimension_numbers=(((2,), (2,)), ((0,), (0,))),
        preferred_element_type=jnp.float32,
    )

    @pl.when(nk == pl.num_programs(1) - 1)
    def _():
        energy = acc_ref[...]                              # (bt, C, C) f32
        # softmax(rowmax - energy) == exp(rowmin - energy) / rowsum(...)
        e_min = jnp.min(energy, axis=-1, keepdims=True)
        p = jnp.exp(e_min - energy)
        s = jnp.sum(p, axis=-1, keepdims=True)
        inv = pl.reciprocal(s, approx=True)
        inv = inv * (2.0 - s * inv)                        # one Newton step
        attention = p * inv

        # Fold gamma and the residual:  gamma*(A @ X) + X == (gamma*A + I) @ X
        bt, c, _ = attention.shape
        row = lax.broadcasted_iota(jnp.int32, (bt, c, c), 1)
        col = lax.broadcasted_iota(jnp.int32, (bt, c, c), 2)
        eye = (row == col).astype(jnp.float32)
        gamma = gamma_ref[0]
        attn_ref[...] = (gamma * attention + eye).astype(attn_ref.dtype)


# --------------------------------------------------------------------------
# Pass 2: out_tile = A' @ X_tile   (residual + gamma already folded into A')
# --------------------------------------------------------------------------
def _cam_apply_kernel(attn_ref, x_ref, out_ref):
    out = lax.dot_general(
        attn_ref[...], x_ref[...],
        dimension_numbers=(((2,), (1,)), ((0,), (0,))),
        preferred_element_type=jnp.float32,
    )
    out_ref[...] = out.astype(out_ref.dtype)


# --------------------------------------------------------------------------
# Generation-aware VMEM planning + tile selection
# --------------------------------------------------------------------------
def _vmem_capacity_bytes():
    try:
        info = pltpu.get_tpu_info()
        cap = int(getattr(info, "vmem_capacity_bytes", 0) or 0)
        if cap > 0:
            return cap
    except Exception:
        pass
    return 64 << 20  # assume the smallest (v7x per-TensorCore) if query fails


def _divisors_desc(b, cap):
    return [d for d in range(min(b, cap), 0, -1) if b % d == 0]


def _vmem_plan(B, C, N, x_itemsize):
    """Pick (bt, tn, n_pad, vmem_limit) so the larger of the two kernels'
    footprints fits the generation-specific budget, N tiles are lane-dense
    multiples of 128, and (when B >= 2) at least two batch grid steps remain
    for megacore sharding of the batch axis."""
    cap = _vmem_capacity_bytes()
    if cap >= (128 << 20):          # v5e / v6e: 128 MiB per TensorCore
        budget = 92 << 20
    else:                           # v7x: 64 MiB per TensorCore
        budget = int(cap * 2 // 3)  # ~42 MiB, leaves headroom for internals

    attn_isz = x_itemsize
    cc_f32 = C * C * 4
    n128 = _round_up(N, 128)

    def footprint(bt, tn):
        x_blk = bt * C * tn * x_itemsize
        out_blk = x_blk
        attn_blk = bt * C * C * attn_isz
        # pass 1: double-buffered x input + C*C output, f32 accumulator,
        #         ~3 live C*C f32 softmax temporaries.
        k1 = 2 * x_blk + 2 * attn_blk + bt * cc_f32 + 3 * bt * cc_f32
        # pass 2: triple-buffered x stream, double-buffered attn + output,
        #         plus the f32 matmul result before the cast.
        k2 = 3 * x_blk + 2 * attn_blk + 2 * out_blk + bt * C * tn * 4
        return max(k1, k2)

    max_bt = B if B < 2 else max(1, B // 2)   # keep >= 2 batch steps if B >= 2
    tn_candidates = sorted({min(n128, 512), min(n128, 256), min(n128, 128)},
                           reverse=True)

    bt, tn = 1, min(n128, 128)
    for tn_c in tn_candidates:
        found = False
        for bt_c in _divisors_desc(B, max_bt):
            if footprint(bt_c, tn_c) <= budget:
                bt, tn, found = bt_c, tn_c, True
                break
        if found:
            break

    n_pad = _round_up(N, tn)
    est = footprint(bt, tn)
    vmem_limit = int(min(max(est + (16 << 20), 32 << 20), cap - (8 << 20)))
    return bt, tn, n_pad, vmem_limit


# --------------------------------------------------------------------------
# Wrapper
# --------------------------------------------------------------------------
def cam_module_forward(x, gamma):
    """x: (B, C, H, W); gamma: scalar parameter of shape (1,)."""
    B, C, H, W = x.shape
    N = H * W
    x_isz = jnp.dtype(x.dtype).itemsize
    bt, tn, n_pad, vmem_limit = _vmem_plan(B, C, N, x_isz)
    n_steps = n_pad // tn

    x_flat = x.reshape(B, C, N)
    if n_pad != N:
        # Zero columns are exact: they contribute nothing to energy and the
        # corresponding output columns (sliced off below) come out as zeros.
        x_flat = jnp.pad(x_flat, ((0, 0), (0, 0), (0, n_pad - N)))

    gamma32 = jnp.asarray(gamma, dtype=jnp.float32).reshape((1,))
    attn_isz = x_isz

    # ---------------- pass 1: A' = gamma * softmax(rowmin trick) + I --------
    cost1 = pl.CostEstimate(
        flops=2 * B * C * C * n_pad,
        transcendentals=B * C * C,
        bytes_accessed=B * C * n_pad * x_isz + B * C * C * attn_isz,
    )
    attn = pl.pallas_call(
        _cam_attn_kernel,
        out_shape=jax.ShapeDtypeStruct((B, C, C), x.dtype),
        grid=(B // bt, n_steps),
        in_specs=[
            pl.BlockSpec(memory_space=pltpu.MemorySpace.SMEM),       # gamma
            pl.BlockSpec((bt, C, tn), lambda b, n: (b, 0, n)),       # X tiles
        ],
        out_specs=pl.BlockSpec((bt, C, C), lambda b, n: (b, 0, 0)),
        scratch_shapes=[pltpu.VMEM((bt, C, C), jnp.float32)],
        compiler_params=pltpu.CompilerParams(
            dimension_semantics=("parallel", "arbitrary"),
            vmem_limit_bytes=vmem_limit,
        ),
        cost_estimate=cost1,
    )(gamma32, x_flat)

    # ---------------- pass 2: out = A' @ X  (both grid axes parallel) -------
    x_spec_kwargs = {}
    if n_steps >= 3:
        # Deeper pipeline for the streamed X tiles on memory-bound shapes.
        x_spec_kwargs["pipeline_mode"] = pl.Buffered(3)
    cost2 = pl.CostEstimate(
        flops=2 * B * C * C * n_pad,
        transcendentals=0,
        bytes_accessed=2 * B * C * n_pad * x_isz + B * C * C * attn_isz,
    )
    out_flat = pl.pallas_call(
        _cam_apply_kernel,
        out_shape=jax.ShapeDtypeStruct((B, C, n_pad), x.dtype),
        grid=(B // bt, n_steps),
        in_specs=[
            pl.BlockSpec((bt, C, C), lambda b, n: (b, 0, 0)),        # A'
            pl.BlockSpec((bt, C, tn), lambda b, n: (b, 0, n),
                         **x_spec_kwargs),                           # X tiles
        ],
        out_specs=pl.BlockSpec((bt, C, tn), lambda b, n: (b, 0, n)),
        compiler_params=pltpu.CompilerParams(
            dimension_semantics=("parallel", "parallel"),
            vmem_limit_bytes=vmem_limit,
        ),
        cost_estimate=cost2,
    )(attn, x_flat)

    if n_pad != N:
        out_flat = out_flat[:, :, :N]
    return out_flat.reshape(B, C, H, W)


def cam_module_reference(x, gamma):
    """Pure-JAX reference matching the PyTorch forward exactly."""
    B, C, H, W = x.shape
    xf = x.reshape(B, C, H * W)
    energy = jnp.einsum("bcn,bdn->bcd", xf, xf)
    energy_new = jnp.max(energy, axis=-1, keepdims=True) - energy
    attention = jax.nn.softmax(energy_new, axis=-1)
    out = jnp.einsum("bcd,bdn->bcn", attention, xf).reshape(B, C, H, W)
    return gamma[0] * out + x


if __name__ == "__main__":
    key = jax.random.PRNGKey(0)
    B, C, H, W = 2, 4, 16, 16
    x = jax.random.normal(key, (B, C, H, W), dtype=jnp.float32)

    # Parameter from __init__: gamma = torch.zeros(1)
    gamma = jnp.zeros((1,), dtype=jnp.float32)
    out = jax.block_until_ready(cam_module_forward(x, gamma))
    ref0 = cam_module_reference(x, gamma)

    # Also exercise a nonzero gamma so the attention path actually matters.
    gamma_nz = jnp.full((1,), 0.5, dtype=jnp.float32)
    out_nz = jax.block_until_ready(cam_module_forward(x, gamma_nz))
    ref_nz = cam_module_reference(x, gamma_nz)

    assert jnp.allclose(out, ref0, atol=1e-4, rtol=1e-4)
    assert jnp.allclose(out_nz, ref_nz, atol=1e-4, rtol=1e-4)

    print("KERNEL_OK")
</pallas_src>

<mosaic_0001>
module attributes {stable_mosaic.version = 11 : i64} {
  func.func @_cam_attn_kernel(%arg0: i32, %arg1: i32, %arg2: memref<1xf32, #tpu.memory_space<smem>>, %arg3: memref<1x4x256xf32, #tpu.memory_space<vmem>>, %arg4: memref<1x4x4xf32, #tpu.memory_space<vmem>>, %arg5: memref<1x4x4xf32, #tpu.memory_space<vmem>>) attributes {dimension_semantics = [#tpu.dimension_semantics<parallel>, #tpu.dimension_semantics<arbitrary>], iteration_bounds = array<i64: 2, 1>, scalar_prefetch = 0 : i64, scratch_operands = 1 : i64, tpu.core_type = #tpu.core_type<tc>, window_params = [{transform_indices = @transform_0, window_bounds = array<i64: 1>}, {transform_indices = @transform_1, window_bounds = array<i64: 1, 4, 256>}, {transform_indices = @transform_2, window_bounds = array<i64: 1, 4, 4>}]} {
    %c0_i32 = arith.constant 0 : i32
    %0 = arith.cmpi eq, %arg1, %c0_i32 : i32
    %1 = arith.extui %0 : i1 to i32
    %c0_i32_0 = arith.constant 0 : i32
    %2 = arith.cmpi ne, %1, %c0_i32_0 : i32
    scf.if %2 {
      %cst_11 = arith.constant 0.000000e+00 : f32
      %11 = vector.broadcast %cst_11 : f32 to vector<1x4x4xf32>
      %c0_12 = arith.constant 0 : index
      %c0_13 = arith.constant 0 : index
      %c0_14 = arith.constant 0 : index
      %12 = vector.load %arg5[%c0_12, %c0_13, %c0_14] : memref<1x4x4xf32, #tpu.memory_space<vmem>>, vector<1x4x4xf32>
      tpu.vector_store %arg5[%c0_12, %c0_13, %c0_14], %11 {strides = array<i32>} : memref<1x4x4xf32, #tpu.memory_space<vmem>>, vector<1x4x4xf32>,
    } else {
    }
    %c0 = arith.constant 0 : index
    %c0_1 = arith.constant 0 : index
    %c0_2 = arith.constant 0 : index
    %3 = vector.load %arg3[%c0, %c0_1, %c0_2] : memref<1x4x256xf32, #tpu.memory_space<vmem>>, vector<1x4x256xf32>
    %c0_3 = arith.constant 0 : index
    %c0_4 = arith.constant 0 : index
    %c0_5 = arith.constant 0 : index
    %4 = vector.load %arg5[%c0_3, %c0_4, %c0_5] : memref<1x4x4xf32, #tpu.memory_space<vmem>>, vector<1x4x4xf32>
    %cst = arith.constant dense<0.000000e+00> : vector<1x4x4xf32>
    %5 = tpu.matmul %3, %3, %cst {dimension_numbers = #tpu.dot_dimension_numbers<[2], [2], [1], [1], [0, 0, 0, 1, 1, 1], [0], [0]>} : vector<1x4x256xf32>, vector<1x4x256xf32>, vector<1x4x4xf32> -> vector<1x4x4xf32>
    %6 = arith.addf %4, %5 : vector<1x4x4xf32>
    %c0_6 = arith.constant 0 : index
    %c0_7 = arith.constant 0 : index
    %c0_8 = arith.constant 0 : index
    %7 = vector.load %arg5[%c0_6, %c0_7, %c0_8] : memref<1x4x4xf32, #tpu.memory_space<vmem>>, vector<1x4x4xf32>
    tpu.vector_store %arg5[%c0_6, %c0_7, %c0_8], %6 {strides = array<i32>} : memref<1x4x4xf32, #tpu.memory_space<vmem>>, vector<1x4x4xf32>,
    %c0_i32_9 = arith.constant 0 : i32
    %8 = arith.cmpi eq, %arg1, %c0_i32_9 : i32
    %9 = arith.extui %8 : i1 to i32
    %c0_i32_10 = arith.constant 0 : i32
    %10 = arith.cmpi ne, %9, %c0_i32_10 : i32
    scf.if %10 {
      %c0_11 = arith.constant 0 : index
      %c0_12 = arith.constant 0 : index
      %c0_13 = arith.constant 0 : index
      %11 = vector.load %arg5[%c0_11, %c0_12, %c0_13] : memref<1x4x4xf32, #tpu.memory_space<vmem>>, vector<1x4x4xf32>
      %cst_14 = arith.constant dense<0x7F800000> : vector<1x4xf32>
      %12 = vector.multi_reduction <minimumf>, %11, %cst_14 [2] : vector<1x4x4xf32> to vector<1x4xf32>
      %13 = vector.shape_cast %12 : vector<1x4xf32> to vector<1x4x1xf32>
      %14 = vector.broadcast %13 : vector<1x4x1xf32> to vector<1x4x4xf32>
      %15 = arith.subf %14, %11 : vector<1x4x4xf32>
      %16 = math.exp %15 : vector<1x4x4xf32>
      %cst_15 = arith.constant dense<0.000000e+00> : vector<1x4xf32>
      %17 = vector.multi_reduction <add>, %16, %cst_15 [2] : vector<1x4x4xf32> to vector<1x4xf32>
      %18 = vector.shape_cast %17 : vector<1x4xf32> to vector<1x4x1xf32>
      %19 = tpu.reciprocal %18 {approx = true} : vector<1x4x1xf32> -> vector<1x4x1xf32>
      %20 = arith.mulf %18, %19 : vector<1x4x1xf32>
      %cst_16 = arith.constant 2.000000e+00 : f32
      %21 = vector.broadcast %cst_16 : f32 to vector<1x4x1xf32>
      %22 = arith.subf %21, %20 : vector<1x4x1xf32>
      %23 = arith.mulf %19, %22 : vector<1x4x1xf32>
      %24 = vector.broadcast %23 : vector<1x4x1xf32> to vector<1x4x4xf32>
      %25 = arith.mulf %16, %24 : vector<1x4x4xf32>
      %26 = tpu.iota {dimensions = array<i32: 1>} : vector<1x4x4xi32>
      %27 = tpu.iota {dimensions = array<i32: 2>} : vector<1x4x4xi32>
      %28 = arith.cmpi eq, %26, %27 : vector<1x4x4xi32>
      %29 = arith.extui %28 : vector<1x4x4xi1> to vector<1x4x4xi32>
      %30 = arith.sitofp %29 : vector<1x4x4xi32> to vector<1x4x4xf32>
      %c0_17 = arith.constant 0 : index
      %31 = memref.load %arg2[%c0_17] : memref<1xf32, #tpu.memory_space<smem>>
      %32 = vector.broadcast %31 : f32 to vector<1x4x4xf32>
      %33 = arith.mulf %32, %25 : vector<1x4x4xf32>
      %34 = arith.addf %33, %30 : vector<1x4x4xf32>
      %c0_18 = arith.constant 0 : index
      %c0_19 = arith.constant 0 : index
      %c0_20 = arith.constant 0 : index
      %35 = vector.load %arg4[%c0_18, %c0_19, %c0_20] : memref<1x4x4xf32, #tpu.memory_space<vmem>>, vector<1x4x4xf32>
      tpu.vector_store %arg4[%c0_18, %c0_19, %c0_20], %34 {strides = array<i32>} : memref<1x4x4xf32, #tpu.memory_space<vmem>>, vector<1x4x4xf32>,
    } else {
    }
    return
  }
  func.func @transform_0(%arg0: i32, %arg1: i32) -> i32 {
    %c0_i32 = arith.constant 0 : i32
    %c0_i32_0 = arith.constant 0 : i32
    return %c0_i32 : i32
  }
  func.func @transform_1(%arg0: i32, %arg1: i32) -> (i32, i32, i32) {
    %c0_i32 = arith.constant 0 : i32
    %c0_i32_0 = arith.constant 0 : i32
    return %arg0, %c0_i32, %arg1 : i32, i32, i32
  }
  func.func @transform_2(%arg0: i32, %arg1: i32) -> (i32, i32, i32) {
    %c0_i32 = arith.constant 0 : i32
    %c0_i32_0 = arith.constant 0 : i32
    %c0_i32_1 = arith.constant 0 : i32
    return %arg0, %c0_i32, %c0_i32_0 : i32, i32, i32
  }
}

</mosaic_0001>

<llo_original>
// kernel: tpu_custom_call.1
$region0: #{tpu_custom_call.1}
  #allocation0 [shape = 'u32[]', space=smem, size = 0x4, offset = 0x4, fixed_abs, tag = 'smem constant byte address 0x4 - core index']
  #allocation1 [shape = 'u32[72,128]{1,0:T(1,128)}', space=vmem, size = 0x9000, scoped, tag = 'internal scratch']
  #allocation2 [shape = 'f32[1,4,4]{2,1,0:T(4,128)}', space=vmem, size = 0x800, scoped, tag = 'scratch operand']
  #allocation3 [shape = 'f32[1]{0:T(128)S(6)}', space=smem, size = 0x200, scoped, tag = 'scoped memory for tpu_custom_call.1']
  %s0 = inlined_call_operand.<no memory space> [shape: f32[1], index: 0, kind: input, shape index: {}]
  %s1 = inlined_call_operand.hbm [shape: f32[2,4,256], index: 1, kind: input, shape index: {}]
  %s2 = inlined_call_operand.hbm [shape: f32[2,4,4], index: 2, kind: output, shape index: {}]
  %s3 = sld [smem:[#allocation0]]
  $region53: #{tpu_custom_call.1} parent=0
    _
  %s5 = ssub.s32 1, %s3
  %s6 = scalar_select 0, %s5, %s3
  %7 = sst [smem:[#allocation3]] %s0
  $region1: #{tpu_custom_call.1} parent=0
    #allocation4 [shape = 'u8[8192]{0}', space=vmem, size = 0x2000, scoped, tag = 'input window, operand 1']
    #allocation5 [shape = 's32[2]{0}', space=sflag, size = 0x8, scoped, tag = 'scoped memory for tpu_custom_call.1']
    #allocation6 [shape = 's32[2]{0}', space=sflag, size = 0x8, scoped, tag = 'scoped memory for tpu_custom_call.1']
    #allocation7 [shape = 'u8[4096]{0}', space=vmem, size = 0x1000, scoped, tag = 'output window, operand 0']
    %8 = vsyncpa [#allocation5], 0
    %s9 = scalar_lea.sflag [#allocation5], 1
    %10 = vsyncpa %s9, 0
    %11 = vsyncpa [#allocation6], 0
    %s12 = scalar_lea.sflag [#allocation6], 1
    %13 = vsyncpa %s12, 0
    loop: start=0, step=1, limit=4
    $region2: #{tpu_custom_call.1} parent=1 // loop_pre_header
      _
    $region3: #{tpu_custom_call.1} parent=1 // loop_header
      %s15 = sphi 0, %s19
      %p16 = scmp.ge.s32.totalorder %s15, 4
      %s22 = sphi 0, %s34
      %s23 = sphi 0, %s30
      %s24 = sphi 0, %s22
      %s25 = sphi 0, %s23
      %s26 = sphi 0, %s24
      %s27 = sphi 0, %s25
      %s35 = sphi 0, %s35
      %s37 = sphi 0, %s35
      %s38 = sphi 0, %s37
      %s52 = sphi 0, %s38
      %s60 = sphi 0, %s62
      %s63 = sphi 0, %s60
      %s64 = sphi 0, %s63
      %s80 = sphi 0, %s64
      %s86 = sphi 0, %s88
      %s89 = sphi 0, %s86
      %s90 = sphi 0, %s89
      %s106 = sphi 0, %s90
    $region4: #{tpu_custom_call.1} parent=1 // loop_header_branch
      %18 = sbr.rel (%p16) target = $region8
    $region5: #{tpu_custom_call.1} parent=1 // loop_body
      %s20 = ssub.s32 %s15, 1
      %s21 = ssub.s32 %s15, 2
      %s28 = sadd.s32 1, %s23
      %p29 = scmp.ge.s32.totalorder %s28, 1
      %s30 = scalar_select %p29, 0, %s28
      %s31 = sadd.s32 1, %s22
      %s32 = scalar_select %p29, %s31, %s22
      %p33 = scmp.ge.s32.totalorder %s32, 2
      %s34 = scalar_select %p33, 0, %s32
      %s36 = sadd.s32 %s35, 1
      %p39 = scmp.eq.s32.totalorder %s15, 1
      %p40 = scmp.ne.s32.totalorder %s35, %s37
      %p41 = scmp.eq.s32.totalorder %s15, 0
      %p42 = por %p40, %p41
      %p43 = scmp.ne.s32.totalorder %s35, %s37
      %p44 = scmp.eq.s32.totalorder %s20, 1
      %p45 = por %p43, %p44
      %p46 = scmp.ne.s32.totalorder %s37, %s38
      %p47 = scmp.eq.s32.totalorder %s20, 0
      %p48 = por %p46, %p47
      %p49 = scmp.ne.s32.totalorder %s37, %s38
      %p50 = scmp.eq.s32.totalorder %s21, 1
      %p51 = por %p49, %p50
      %p53 = scmp.ne.s32.totalorder %s38, %s52
      %p54 = scmp.eq.s32.totalorder %s21, 0
      %p55 = por %p53, %p54
      %s56 = ssub.s32 %s22, %s34
      %s57 = ssub.s32 %s23, %s30
      %s58 = sor.u32 %s56, %s57
      %p59 = scmp.eq.s32.totalorder %s58, 0
      %s61 = sadd.s32 %s60, 1
      %s62 = scalar_select %p59, %s60, %s61
      %p65 = pneg %p59
      %p66 = scmp.eq.s32.totalorder %s15, 1
      %p67 = por %p65, %p66
      %p68 = scmp.ne.s32.totalorder %s60, %s63
      %p69 = scmp.eq.s32.totalorder %s15, 0
      %p70 = por %p68, %p69
      %p71 = scmp.ne.s32.totalorder %s60, %s63
      %p72 = scmp.eq.s32.totalorder %s20, 1
      %p73 = por %p71, %p72
      %p74 = scmp.ne.s32.totalorder %s63, %s64
      %p75 = scmp.eq.s32.totalorder %s20, 0
      %p76 = por %p74, %p75
      %p77 = scmp.ne.s32.totalorder %s63, %s64
      %p78 = scmp.eq.s32.totalorder %s21, 1
      %p79 = por %p77, %p78
      %p81 = scmp.ne.s32.totalorder %s64, %s80
      %p82 = scmp.eq.s32.totalorder %s21, 0
      %p83 = por %p81, %p82
      %s84 = ssub.s32 %s22, %s34
      %p85 = scmp.eq.s32.totalorder %s84, 0
      %s87 = sadd.s32 %s86, 1
      %s88 = scalar_select %p85, %s86, %s87
      %p91 = pneg %p85
      %p92 = scmp.eq.s32.totalorder %s15, 1
      %p93 = por %p91, %p92
      %p94 = scmp.ne.s32.totalorder %s86, %s89
      %p95 = scmp.eq.s32.totalorder %s15, 0
      %p96 = por %p94, %p95
      %p97 = scmp.ne.s32.totalorder %s86, %s89
      %p98 = scmp.eq.s32.totalorder %s20, 1
      %p99 = por %p97, %p98
      %p100 = scmp.ne.s32.totalorder %s89, %s90
      %p101 = scmp.eq.s32.totalorder %s20, 0
      %p102 = por %p100, %p101
      %p103 = scmp.ne.s32.totalorder %s89, %s90
      %p104 = scmp.eq.s32.totalorder %s21, 1
      %p105 = por %p103, %p104
      %p107 = scmp.ne.s32.totalorder %s90, %s106
      %p108 = scmp.eq.s32.totalorder %s21, 0
      %p109 = por %p107, %p108
      %p110 = scmp.le.s32.totalorder 1, %s15
      %p111 = scmp.lt.s32.totalorder %s15, 3
      %p112 = pnand %p110, %p111
      %p113 = pneg %p112
      // Predicated region
      $region9: #{tpu_custom_call.1} parent=5 // pred_check
        _
      $region10: #{tpu_custom_call.1} parent=5 // pred_check_branch
        %115 = sbr.rel (%p112) target = $region12
      $region11: #{tpu_custom_call.1} parent=5 // pred_region
        %s116 = ssub.s32 %s15, 1
        // Predicated region
        $region13: #{tpu_custom_call.1} parent=11 // pred_check
          %p117 = pneg %p48
        $region14: #{tpu_custom_call.1} parent=11 // pred_check_branch
          %119 = sbr.rel (%p117) target = $region16
        $region15: #{tpu_custom_call.1} parent=11 // pred_region
          _
        $region16: #{tpu_custom_call.1} parent=11 // pred_fallthru
          _
      $region12: #{tpu_custom_call.1} parent=5 // pred_fallthru
        _
      %p120 = scmp.lt.s32.totalorder %s15, 2
      // Predicated region
      $region17: #{tpu_custom_call.1} parent=5 // pred_check
        %p121 = pneg %p120
      $region18: #{tpu_custom_call.1} parent=5 // pred_check_branch
        %123 = sbr.rel (%p121) target = $region20
      $region19: #{tpu_custom_call.1} parent=5 // pred_region
        // Predicated region
        $region21: #{tpu_custom_call.1} parent=19 // pred_check
          %p124 = pneg %p70
        $region22: #{tpu_custom_call.1} parent=19 // pred_check_branch
          %126 = sbr.rel (%p124) target = $region24
        $region23: #{tpu_custom_call.1} parent=19 // pred_region
          %s127 = sand.u32 %s60, 1
          %s128 = scalar_lea.sflag [#allocation5], %s127
          %s129 = sand.u32 %s60, 1
          %s130 = smul.addr %s129, 8
          %s131 = scalar_lea.vmem [#allocation4], %s130
          %s132 = smul.u32 2, %s23
          %134 = vsyncadd %s128, 0
          %s135 = smul.addr %s22, 2
          %s136 = sadd.s32 %s132, %s135
          %s137 = smul.addr %s136, 4
          %s138 = scalar_lea.hbm %s1, %s137
          %s140 = sshll.u32 %s138, 4
          %s141 = int_to_ptr.hbm [resolvable:$true] %s140
          %s142 = sshll.u32 %s131, 4
          %s143 = int_to_ptr.vmem [resolvable:$true] %s142
          %145 = dma.hbm_to_vmem [thread:$0]  %s141, 128, %s143, %s128
        $region24: #{tpu_custom_call.1} parent=19 // pred_fallthru
          _
      $region20: #{tpu_custom_call.1} parent=5 // pred_fallthru
        _
      %p146 = scmp.le.s32.totalorder 1, %s15
      %p147 = scmp.lt.s32.totalorder %s15, 3
      %p148 = pnand %p146, %p147
      %p149 = pneg %p148
      // Predicated region
      $region25: #{tpu_custom_call.1} parent=5 // pred_check
        _
      $region26: #{tpu_custom_call.1} parent=5 // pred_check_branch
        %151 = sbr.rel (%p148) target = $region28
      $region27: #{tpu_custom_call.1} parent=5 // pred_region
        %s152 = ssub.s32 %s15, 1
        %s153 = sand.u32 %s63, 1
        %s154 = scalar_lea.sflag [#allocation5], %s153
        %s155 = sand.u32 %s63, 1
        %s156 = smul.addr %s155, 8
        %s157 = scalar_lea.vmem [#allocation4], %s156
        // Predicated region
        $region29: #{tpu_custom_call.1} parent=27 // pred_check
          %p158 = pneg %p76
        $region30: #{tpu_custom_call.1} parent=27 // pred_check_branch
          %160 = sbr.rel (%p158) target = $region32
        $region31: #{tpu_custom_call.1} parent=27 // pred_region
          %162 = dma.done %s154, 128
        $region32: #{tpu_custom_call.1} parent=27 // pred_fallthru
          _
        %p163 = pneg %p48
        %p164 = pneg %p45
        %s165 = sand.u32 %s63, 1
        %s166 = scalar_lea.sflag [#allocation5], %s165
        %s167 = sand.u32 %s63, 1
        %s168 = smul.addr %s167, 8
        %s169 = scalar_lea.vmem [#allocation4], %s168
        %p170 = pneg %p76
        %p171 = pneg %p73
        %p172 = pneg %p102
        %p173 = pneg %p99
        %s174 = sand.u32 %s89, 1
        %s175 = scalar_lea.sflag [#allocation6], %s174
        %s176 = sand.u32 %s89, 1
        %s177 = smul.addr %s176, 4
        %s178 = scalar_lea.vmem [#allocation7], %s177
        %s179 = smul.u32 2, %s25
        %p180 = scmp.eq.s32.totalorder %s25, 0
        // Predicated region
        $region33: #{tpu_custom_call.1} parent=27 // pred_check
          %p181 = pneg %p180
        $region34: #{tpu_custom_call.1} parent=27 // pred_check_branch
          %183 = sbr.rel (%p181) target = $region36
        $region35: #{tpu_custom_call.1} parent=27 // pred_region
          %vm184 = vcmask 27648
          %185 = vst.msk [vmem:[#allocation2] sm:$0xf] %vm184, 0.0
        $region36: #{tpu_custom_call.1} parent=27 // pred_fallthru
          _
        %v186 = vld [vmem:[%s157] sm:$0xff]
        %v187 = vld [vmem:[#allocation2] sm:$0xf]
        %189 = vst [vmem:[#allocation1] ss:$2 sm:$0xff] %v186
        %v190 = vld.sshfl [vmem:[#allocation1] sm:$0xff pattern:$0x75316420]
        %v191 = vld.sshfl [vmem:[#allocation1 + $0x8] sm:$0xff pattern:$0x75316420]
        %194 = vst [vmem:[#allocation1] ss:$2 sm:$0xff] %v186
        %v195 = vld.sshfl [vmem:[#allocation1] sm:$0xff pattern:$0x75316420]
        %v196 = vld.sshfl [vmem:[#allocation1 + $0x8] sm:$0xff pattern:$0x75316420]
        %199 = vmatpush.xpose.msra.mxu0 0.0
        %200 = vmatpush.xpose.msra.mxu0 0.0
        %201 = vmatpush.xpose.msra.mxu0 0.0
        %202 = vmatpush.xpose.msra.mxu0 0.0
        %203 = vmatpush.xpose.msra.mxu0 0.0
        %204 = vmatpush.xpose.msra.mxu0 0.0
        %205 = vmatpush.xpose.msra.mxu0 0.0
        %206 = vmatpush.xpose.msra.mxu0 0.0
        %207 = vmatpush.xpose.msra.mxu0 0.0
        %208 = vmatpush.xpose.msra.mxu0 0.0
        %209 = vmatpush.xpose.msra.mxu0 0.0
        %210 = vmatpush.xpose.msra.mxu0 0.0
        %211 = vmatpush.xpose.msra.mxu0 0.0
        %212 = vmatpush.xpose.msra.mxu0 0.0
        %213 = vmatpush.xpose.msra.mxu0 0.0
        %214 = vmatpush.xpose.msra.mxu0 %v195
        %215 = vmatmul.f32.gmra.mxu0 %v190
        %v216 = vpop.f32.mrf.mxu0
        %v217 = vadd.f32 0.0, %v216
        %218 = vdwg.mxu0
        %219 = vmatpush.xpose.msra.mxu0 0.0
        %220 = vmatpush.xpose.msra.mxu0 0.0
        %221 = vmatpush.xpose.msra.mxu0 0.0
        %222 = vmatpush.xpose.msra.mxu0 0.0
        %223 = vmatpush.xpose.msra.mxu0 0.0
        %224 = vmatpush.xpose.msra.mxu0 0.0
        %225 = vmatpush.xpose.msra.mxu0 0.0
        %226 = vmatpush.xpose.msra.mxu0 0.0
        %227 = vmatpush.xpose.msra.mxu0 0.0
        %228 = vmatpush.xpose.msra.mxu0 0.0
        %229 = vmatpush.xpose.msra.mxu0 0.0
        %230 = vmatpush.xpose.msra.mxu0 0.0
        %231 = vmatpush.xpose.msra.mxu0 0.0
        %232 = vmatpush.xpose.msra.mxu0 0.0
        %233 = vmatpush.xpose.msra.mxu0 0.0
        %234 = vmatpush.xpose.msra.mxu0 %v196
        %235 = vmatmul.f32.gmra.mxu0 %v191
        %v236 = vpop.f32.mrf.mxu0
        %v237 = vadd.f32 %v217, %v236
        %238 = vdwg.mxu0
        %v239 = vadd.f32 %v187, %v237
        %vm240 = vcmask 27648
        %241 = vst.msk [vmem:[#allocation2] sm:$0xf] %vm240, %v239
        // Predicated region
        $region37: #{tpu_custom_call.1} parent=27 // pred_check
          %p242 = pneg %p180
        $region38: #{tpu_custom_call.1} parent=27 // pred_check_branch
          %244 = sbr.rel (%p242) target = $region40
        $region39: #{tpu_custom_call.1} parent=27 // pred_region
          %v245 = vld [vmem:[#allocation2] sm:$0xf]
          %v246 = vsel %vm240, %v245, inf
          %247 = vmin.xlane.f32.xlu0 %v246
          %v248 = vpop.xlane.xlu0 %247
          %v249 = vsub.f32 %v248, %v245
          %v250 = vmul.f32 %v249, 1.442695
          %v251 = vpow.pop %v250
          %v252 = vsel %vm240, %v251, 0.0
          %253 = vadd.xlane.f32.xlu0 %v252
          %v254 = vpop.xlane.xlu0 %253
          %v255 = vrcp.pop %v254
          %v256 = vmul.f32 %v254, %v255
          %v257 = vsub.f32 2.0, %v256
          %v258 = vmul.f32 %v255, %v257
          %v259 = vmul.f32 %v251, %v258
          %v260 = vlaneseq
          %v261 = vshrl.u32 %v260, 7
          %v262 = vlaneseq
          %v263 = vand.u32 %v262, 127
          %vm264 = vcmp.eq.s32.totalorder %v261, %v263
          %v265 = vsel %vm264, 1, 0
          %v266 = vcvt.s32.f32 %v265
          %s267 = sld [smem:[#allocation3]]
          %v268 = vstv %s267
          %v269 = vmul.f32 %v268, %v259
          %v270 = vadd.f32 %v269, %v266
          %271 = vst.msk [vmem:[%s178] sm:$0xf] %vm240, %v270
        $region40: #{tpu_custom_call.1} parent=27 // pred_fallthru
          _
        %s272 = sand.u32 %s89, 1
        %s273 = scalar_lea.sflag [#allocation6], %s272
        %s274 = sand.u32 %s89, 1
        %s275 = smul.addr %s274, 4
        %s276 = scalar_lea.vmem [#allocation7], %s275
        // Predicated region
        $region41: #{tpu_custom_call.1} parent=27 // pred_check
          %p277 = pneg %p99
        $region42: #{tpu_custom_call.1} parent=27 // pred_check_branch
          %279 = sbr.rel (%p277) target = $region44
        $region43: #{tpu_custom_call.1} parent=27 // pred_region
          %281 = vsyncadd %s273, 0
          %s282 = smul.addr %s24, 4
          %s283 = scalar_lea.hbm %s2, %s282
          %s285 = sshll.u32 %s276, 4
          %s286 = int_to_ptr.vmem [resolvable:$true] %s285
          %s287 = sshll.u32 %s283, 4
          %s288 = int_to_ptr.hbm [resolvable:$true] %s287
          %290 = dma.vmem_to_hbm [thread:$0]  %s286, 64, %s288, %s273
        $region44: #{tpu_custom_call.1} parent=27 // pred_fallthru
          _
      $region28: #{tpu_custom_call.1} parent=5 // pred_fallthru
        _
      %p291 = scmp.le.s32.totalorder 2, %s15
      // Predicated region
      $region45: #{tpu_custom_call.1} parent=5 // pred_check
        %p292 = pneg %p291
      $region46: #{tpu_custom_call.1} parent=5 // pred_check_branch
        %294 = sbr.rel (%p292) target = $region48
      $region47: #{tpu_custom_call.1} parent=5 // pred_region
        %s295 = ssub.s32 %s15, 2
        // Predicated region
        $region49: #{tpu_custom_call.1} parent=47 // pred_check
          %p296 = pneg %p105
        $region50: #{tpu_custom_call.1} parent=47 // pred_check_branch
          %298 = sbr.rel (%p296) target = $region52
        $region51: #{tpu_custom_call.1} parent=47 // pred_region
          %s299 = sand.u32 %s90, 1
          %s300 = scalar_lea.sflag [#allocation6], %s299
          %s301 = sand.u32 %s90, 1
          %s302 = smul.addr %s301, 4
          %s303 = scalar_lea.vmem [#allocation7], %s302
          %305 = dma.done %s300, 64
        $region52: #{tpu_custom_call.1} parent=47 // pred_fallthru
          _
      $region48: #{tpu_custom_call.1} parent=5 // pred_fallthru
        _
    $region6: #{tpu_custom_call.1} parent=1 // loop_footer
      %s19 = sadd.s32 1, %s15
    $region7: #{tpu_custom_call.1} parent=1 // loop_footer_branch
      %14 = sbr.rel target = $region3
    $region8: #{tpu_custom_call.1} parent=1 // loop_exit
      _
    %306 = vsyncpa [#allocation5], 1
    %s307 = scalar_lea.sflag [#allocation5], 1
    %308 = vsyncpa %s307, 1
    %309 = vsyncpa [#allocation6], 1
    %s310 = scalar_lea.sflag [#allocation6], 1
    %311 = vsyncpa %s310, 1

</llo_original>
